<compile_context>
chip_gen: v6e
topology: v6e:2x2x1
jax: 0.10.0
libtpu: 0.0.40
codegen_flags: <defaults>
</compile_context>

<pallas_src>
import jax
import jax.numpy as jnp
from jax.experimental import pallas as pl
from jax.experimental.pallas import tpu as pltpu

INPUT_SIZE = 2
HIDDEN = 128
OUTPUT_SIZE = 2

_VMEM_LIMIT_BYTES = 48 * 1024 * 1024   # < 64 MiB (v7x physical), >> defaults


# ---------------------------------------------------------------------------
# Row-major kernel (PyTorch layout): x block (tile_b, 2) -> out block (tile_b, 2)
# ---------------------------------------------------------------------------
def _generator_kernel(x_ref, w1_ref, b1_ref, w2_ref, b2_ref, o_ref):
    # x_ref:  (tb, 2)
    # w1_ref: (2, 128), b1_ref: (1, 128)
    # w2_ref: (128, 2), b2_ref: (1, 2)
    # o_ref:  (tb, 2)
    x = x_ref[...]
    # Layer 1 on the MXU (it is otherwise idle); f32 accumulation.
    h = jnp.dot(x, w1_ref[...], preferred_element_type=jnp.float32) + b1_ref[...]
    h = jnp.maximum(h, 0.0)
    # Cast h back to the activation dtype (bf16 in -> bf16 MXU operands,
    # f32 in -> no-op); layer 2 accumulates in f32 either way.
    h = h.astype(x.dtype)
    y = jnp.dot(h, w2_ref[...], preferred_element_type=jnp.float32) + b2_ref[...]
    o_ref[...] = y.astype(o_ref.dtype)


# ---------------------------------------------------------------------------
# Feature-major (lane-dense) kernel: x block (2, tile_b) -> out block (2, tile_b)
# Batch sits on the 128-lane axis => dense, unmasked loads/stores.
# ---------------------------------------------------------------------------
def _generator_fm_kernel(x_ref, w1t_ref, b1t_ref, w2t_ref, b2t_ref, o_ref):
    # x_ref:   (2, tb)
    # w1t_ref: (128, 2), b1t_ref: (128, 1)
    # w2t_ref: (2, 128), b2t_ref: (2, 1)
    # o_ref:   (2, tb)
    x = x_ref[...]
    h = jnp.dot(w1t_ref[...], x, preferred_element_type=jnp.float32) + b1t_ref[...]
    h = jnp.maximum(h, 0.0)
    h = h.astype(x.dtype)
    y = jnp.dot(w2t_ref[...], h, preferred_element_type=jnp.float32) + b2t_ref[...]
    o_ref[...] = y.astype(o_ref.dtype)


def _default_tile_b(B, align, cap):
    """Pick the largest aligned batch tile <= cap, keeping >= 2 grid blocks
    when possible (v7x megacore: 2 TensorCores share the "parallel" axis)."""
    if B < 2 * align:
        return B                                   # single (possibly ragged) block
    tb = min(cap, pl.cdiv(B, 2))                   # >= 2 blocks for megacore
    return max(align, (tb // align) * align)


def _weight_bytes(itemsize):
    return itemsize * (INPUT_SIZE * HIDDEN + HIDDEN
                       + HIDDEN * OUTPUT_SIZE + OUTPUT_SIZE)


def _cost_estimate_row_major(B, itemsize):
    flops = 2 * B * INPUT_SIZE * HIDDEN + 2 * B * HIDDEN * OUTPUT_SIZE
    # (B, 2) f32/bf16 arrays are (8,128)-tile padded in HBM: ~B*128 elems each.
    bytes_accessed = 2 * B * 128 * itemsize + _weight_bytes(itemsize)
    return pl.CostEstimate(flops=flops, transcendentals=0,
                           bytes_accessed=bytes_accessed)


def _cost_estimate_feature_major(B, itemsize):
    flops = 2 * B * INPUT_SIZE * HIDDEN + 2 * B * HIDDEN * OUTPUT_SIZE
    # (2, B) arrays pad the sublane dim 2 -> 8: ~8*B elems each.
    bytes_accessed = 2 * 8 * B * itemsize + _weight_bytes(itemsize)
    return pl.CostEstimate(flops=flops, transcendentals=0,
                           bytes_accessed=bytes_accessed)


def generator_forward(x, w1, b1, w2, b2, *, tile_b=None):
    """PyTorch-layout compatibility path: x (B, 2) -> (B, 2).

    w1: (2, 128), b1: (1, 128), w2: (128, 2), b2: (1, 2)
    (weights stored as (in, out); x @ W + b == PyTorch's x @ W.T + b).
    Prefer generator_forward_feature_major for the hot path.
    """
    B, in_dim = x.shape
    assert in_dim == INPUT_SIZE
    if tile_b is None:
        tile_b = _default_tile_b(B, align=8, cap=4096)
    grid = (pl.cdiv(B, tile_b),)
    return pl.pallas_call(
        _generator_kernel,
        out_shape=jax.ShapeDtypeStruct((B, OUTPUT_SIZE), x.dtype),
        grid_spec=pltpu.PrefetchScalarGridSpec(
            num_scalar_prefetch=0,
            grid=grid,
            in_specs=[
                # batch-tiled activations
                pl.BlockSpec((tile_b, INPUT_SIZE), lambda i: (i, 0)),
                # weights/biases: full arrays, resident for every grid step
                pl.BlockSpec((INPUT_SIZE, HIDDEN), lambda i: (0, 0)),
                pl.BlockSpec((1, HIDDEN), lambda i: (0, 0)),
                pl.BlockSpec((HIDDEN, OUTPUT_SIZE), lambda i: (0, 0)),
                pl.BlockSpec((1, OUTPUT_SIZE), lambda i: (0, 0)),
            ],
            out_specs=pl.BlockSpec((tile_b, OUTPUT_SIZE), lambda i: (i, 0)),
        ),
        compiler_params=pltpu.CompilerParams(
            dimension_semantics=("parallel",),
            vmem_limit_bytes=_VMEM_LIMIT_BYTES),
        cost_estimate=_cost_estimate_row_major(B, x.dtype.itemsize),
    )(x, w1, b1, w2, b2)


def prepare_feature_major_params(w1, b1, w2, b2):
    """One-off transpose/reshape of the parameters into the lane-dense layout.

    Call once (e.g. at load/update time) and reuse the result across calls so
    the per-call wrapper emits no extra XLA transpose ops.
    """
    w1t = jnp.asarray(w1).T                         # (128, 2)
    b1t = jnp.asarray(b1).reshape(HIDDEN, 1)        # (128, 1)
    w2t = jnp.asarray(w2).T                         # (2, 128)
    b2t = jnp.asarray(b2).reshape(OUTPUT_SIZE, 1)   # (2, 1)
    return w1t, b1t, w2t, b2t


def generator_forward_feature_major(x_fm, fm_params, *, tile_b=None):
    """Lane-dense hot path: x_fm (2, B) -> (2, B).

    `fm_params` is the tuple returned by prepare_feature_major_params().
    Use this path whenever the producer/consumer can supply/accept the
    transposed layout (a wrapper-side transpose would add an HBM pass).
    """
    in_dim, B = x_fm.shape
    assert in_dim == INPUT_SIZE
    w1t, b1t, w2t, b2t = fm_params
    if tile_b is None:
        tile_b = _default_tile_b(B, align=128, cap=8192)
    grid = (pl.cdiv(B, tile_b),)
    return pl.pallas_call(
        _generator_fm_kernel,
        out_shape=jax.ShapeDtypeStruct((OUTPUT_SIZE, B), x_fm.dtype),
        grid_spec=pltpu.PrefetchScalarGridSpec(
            num_scalar_prefetch=0,
            grid=grid,
            in_specs=[
                pl.BlockSpec((INPUT_SIZE, tile_b), lambda i: (0, i)),
                pl.BlockSpec((HIDDEN, INPUT_SIZE), lambda i: (0, 0)),
                pl.BlockSpec((HIDDEN, 1), lambda i: (0, 0)),
                pl.BlockSpec((OUTPUT_SIZE, HIDDEN), lambda i: (0, 0)),
                pl.BlockSpec((OUTPUT_SIZE, 1), lambda i: (0, 0)),
            ],
            out_specs=pl.BlockSpec((OUTPUT_SIZE, tile_b), lambda i: (0, i)),
        ),
        compiler_params=pltpu.CompilerParams(
            dimension_semantics=("parallel",),
            vmem_limit_bytes=_VMEM_LIMIT_BYTES),
        cost_estimate=_cost_estimate_feature_major(B, x_fm.dtype.itemsize),
    )(x_fm, w1t, b1t, w2t, b2t)


def init_params(key):
    # Deterministic init mimicking PyTorch's default Linear init:
    # U(-1/sqrt(fan_in), 1/sqrt(fan_in))
    k1, k2, k3, k4 = jax.random.split(key, 4)
    bound1 = 1.0 / jnp.sqrt(INPUT_SIZE)
    bound2 = 1.0 / jnp.sqrt(HIDDEN)
    w1 = jax.random.uniform(k1, (INPUT_SIZE, HIDDEN), jnp.float32, -bound1, bound1)
    b1 = jax.random.uniform(k2, (1, HIDDEN), jnp.float32, -bound1, bound1)
    w2 = jax.random.uniform(k3, (HIDDEN, OUTPUT_SIZE), jnp.float32, -bound2, bound2)
    b2 = jax.random.uniform(k4, (1, OUTPUT_SIZE), jnp.float32, -bound2, bound2)
    return w1, b1, w2, b2


if __name__ == "__main__":
    key = jax.random.PRNGKey(0)
    kx, kx2, kp = jax.random.split(key, 3)
    w1, b1, w2, b2 = init_params(kp)
    fm_params = prepare_feature_major_params(w1, b1, w2, b2)   # cached once

    # 1) Small batch, PyTorch-style (B, 2) layout (compat path).
    B = 8
    x = jax.random.normal(kx, (B, INPUT_SIZE), dtype=jnp.float32)
    out = jax.block_until_ready(generator_forward(x, w1, b1, w2, b2))
    ref = jnp.maximum(x @ w1 + b1, 0.0) @ w2 + b2
    assert out.shape == (B, OUTPUT_SIZE)
    assert jnp.allclose(out, ref, atol=1e-5, rtol=1e-5)

    # 2) Ragged batch on the compat path: exercises cdiv grid + masked tail.
    B2 = 300
    x2 = jax.random.normal(kx2, (B2, INPUT_SIZE), dtype=jnp.float32)
    out2 = jax.block_until_ready(generator_forward(x2, w1, b1, w2, b2))
    ref2 = jnp.maximum(x2 @ w1 + b1, 0.0) @ w2 + b2
    assert out2.shape == (B2, OUTPUT_SIZE)
    assert jnp.allclose(out2, ref2, atol=1e-5, rtol=1e-5)

    # 3) Lane-dense feature-major hot path (x as (2, B), out as (2, B)).
    x_fm = x2.T
    out_fm = jax.block_until_ready(
        generator_forward_feature_major(x_fm, fm_params))
    assert out_fm.shape == (OUTPUT_SIZE, B2)
    assert jnp.allclose(out_fm.T, ref2, atol=1e-5, rtol=1e-5)

    # 4) bf16 activations/params end-to-end (v6e/v7x): f32 accumulation in
    #    both dots, h downcast to bf16 at the MXU boundary.
    fm_params_bf16 = tuple(p.astype(jnp.bfloat16) for p in fm_params)
    out_bf16 = jax.block_until_ready(
        generator_forward_feature_major(x_fm.astype(jnp.bfloat16),
                                        fm_params_bf16))
    assert out_bf16.shape == (OUTPUT_SIZE, B2)
    assert out_bf16.dtype == jnp.bfloat16
    assert jnp.allclose(out_bf16.astype(jnp.float32).T, ref2,
                        atol=1e-1, rtol=1e-1)

    print("KERNEL_OK")
</pallas_src>

<mosaic_0001>
module attributes {stable_mosaic.version = 11 : i64} {
  func.func @_generator_kernel(%arg0: i32, %arg1: memref<8x2xf32, #tpu.memory_space<vmem>>, %arg2: memref<2x128xf32, #tpu.memory_space<vmem>>, %arg3: memref<1x128xf32, #tpu.memory_space<vmem>>, %arg4: memref<128x2xf32, #tpu.memory_space<vmem>>, %arg5: memref<1x2xf32, #tpu.memory_space<vmem>>, %arg6: memref<8x2xf32, #tpu.memory_space<vmem>>) attributes {dimension_semantics = [#tpu.dimension_semantics<parallel>], iteration_bounds = array<i64: 1>, scalar_prefetch = 0 : i64, scratch_operands = 0 : i64, tpu.core_type = #tpu.core_type<tc>, window_params = [{transform_indices = @transform_0, window_bounds = array<i64: 8, 2>}, {pipeline_mode = #tpu.pipeline_mode<synchronous>, transform_indices = @transform_1, window_bounds = array<i64: 2, 128>}, {pipeline_mode = #tpu.pipeline_mode<synchronous>, transform_indices = @transform_2, window_bounds = array<i64: 1, 128>}, {pipeline_mode = #tpu.pipeline_mode<synchronous>, transform_indices = @transform_3, window_bounds = array<i64: 128, 2>}, {pipeline_mode = #tpu.pipeline_mode<synchronous>, transform_indices = @transform_4, window_bounds = array<i64: 1, 2>}, {transform_indices = @transform_5, window_bounds = array<i64: 8, 2>}]} {
    %c0 = arith.constant 0 : index
    %c0_0 = arith.constant 0 : index
    %0 = vector.load %arg1[%c0, %c0_0] : memref<8x2xf32, #tpu.memory_space<vmem>>, vector<8x2xf32>
    %c0_1 = arith.constant 0 : index
    %c0_2 = arith.constant 0 : index
    %1 = vector.load %arg2[%c0_1, %c0_2] : memref<2x128xf32, #tpu.memory_space<vmem>>, vector<2x128xf32>
    %cst = arith.constant dense<0.000000e+00> : vector<8x128xf32>
    %2 = tpu.matmul %0, %1, %cst {dimension_numbers = #tpu.dot_dimension_numbers<[1], [0], [0], [1], [0, 0, 1, 1], [], []>} : vector<8x2xf32>, vector<2x128xf32>, vector<8x128xf32> -> vector<8x128xf32>
    %c0_3 = arith.constant 0 : index
    %c0_4 = arith.constant 0 : index
    %3 = vector.load %arg3[%c0_3, %c0_4] : memref<1x128xf32, #tpu.memory_space<vmem>>, vector<1x128xf32>
    %4 = vector.broadcast %3 : vector<1x128xf32> to vector<8x128xf32>
    %5 = arith.addf %2, %4 : vector<8x128xf32>
    %cst_5 = arith.constant 0.000000e+00 : f32
    %6 = vector.broadcast %cst_5 : f32 to vector<8x128xf32>
    %7 = arith.maximumf %5, %6 : vector<8x128xf32>
    %c0_6 = arith.constant 0 : index
    %c0_7 = arith.constant 0 : index
    %8 = vector.load %arg4[%c0_6, %c0_7] : memref<128x2xf32, #tpu.memory_space<vmem>>, vector<128x2xf32>
    %cst_8 = arith.constant dense<0.000000e+00> : vector<8x2xf32>
    %9 = tpu.matmul %7, %8, %cst_8 {dimension_numbers = #tpu.dot_dimension_numbers<[1], [0], [0], [1], [0, 0, 1, 1], [], []>} : vector<8x128xf32>, vector<128x2xf32>, vector<8x2xf32> -> vector<8x2xf32>
    %c0_9 = arith.constant 0 : index
    %c0_10 = arith.constant 0 : index
    %10 = vector.load %arg5[%c0_9, %c0_10] : memref<1x2xf32, #tpu.memory_space<vmem>>, vector<1x2xf32>
    %11 = vector.broadcast %10 : vector<1x2xf32> to vector<8x2xf32>
    %12 = arith.addf %9, %11 : vector<8x2xf32>
    %c0_11 = arith.constant 0 : index
    %c0_12 = arith.constant 0 : index
    %13 = vector.load %arg6[%c0_11, %c0_12] : memref<8x2xf32, #tpu.memory_space<vmem>>, vector<8x2xf32>
    tpu.vector_store %arg6[%c0_11, %c0_12], %12 {strides = array<i32>} : memref<8x2xf32, #tpu.memory_space<vmem>>, vector<8x2xf32>,
    return
  }
  func.func @transform_0(%arg0: i32) -> (i32, i32) {
    %c0_i32 = arith.constant 0 : i32
    %c0_i32_0 = arith.constant 0 : i32
    return %arg0, %c0_i32 : i32, i32
  }
  func.func @transform_1(%arg0: i32) -> (i32, i32) {
    %c0_i32 = arith.constant 0 : i32
    %c0_i32_0 = arith.constant 0 : i32
    %c0_i32_1 = arith.constant 0 : i32
    return %c0_i32, %c0_i32_0 : i32, i32
  }
  func.func @transform_2(%arg0: i32) -> (i32, i32) {
    %c0_i32 = arith.constant 0 : i32
    %c0_i32_0 = arith.constant 0 : i32
    %c0_i32_1 = arith.constant 0 : i32
    return %c0_i32, %c0_i32_0 : i32, i32
  }
  func.func @transform_3(%arg0: i32) -> (i32, i32) {
    %c0_i32 = arith.constant 0 : i32
    %c0_i32_0 = arith.constant 0 : i32
    %c0_i32_1 = arith.constant 0 : i32
    return %c0_i32, %c0_i32_0 : i32, i32
  }
  func.func @transform_4(%arg0: i32) -> (i32, i32) {
    %c0_i32 = arith.constant 0 : i32
    %c0_i32_0 = arith.constant 0 : i32
    %c0_i32_1 = arith.constant 0 : i32
    return %c0_i32, %c0_i32_0 : i32, i32
  }
  func.func @transform_5(%arg0: i32) -> (i32, i32) {
    %c0_i32 = arith.constant 0 : i32
    %c0_i32_0 = arith.constant 0 : i32
    return %arg0, %c0_i32 : i32, i32
  }
}

</mosaic_0001>

<llo_original>
// kernel: tpu_custom_call.1
$region0: #{tpu_custom_call.1}
  #allocation0 [shape = 'u32[]', space=smem, size = 0x4, offset = 0x4, fixed_abs, tag = 'smem constant byte address 0x4 - core index']
  #allocation1 [shape = 'u32[144,128]{1,0:T(1,128)}', space=vmem, size = 0x12000, scoped, tag = 'internal scratch']
  %s0 = inlined_call_operand.vmem [shape: f32[8,2], index: 0, kind: input, shape index: {}]
  %s1 = inlined_call_operand.vmem [shape: f32[2,128], index: 1, kind: input, shape index: {}]
  %s2 = inlined_call_operand.vmem [shape: f32[1,128], index: 2, kind: input, shape index: {}]
  %s3 = inlined_call_operand.vmem [shape: f32[128,2], index: 3, kind: input, shape index: {}]
  %s4 = inlined_call_operand.vmem [shape: f32[1,2], index: 4, kind: input, shape index: {}]
  %s5 = inlined_call_operand.vmem [shape: f32[8,2], index: 5, kind: output, shape index: {}]
  %s6 = sld [smem:[#allocation0]]
  $region30: #{tpu_custom_call.1} parent=0
    _
  %s8 = ssub.s32 1, %s6
  %s9 = scalar_select 0, %s8, %s6
  // Predicated region
  $region2: #{tpu_custom_call.1} parent=0 // pred_check
    _
  $region3: #{tpu_custom_call.1} parent=0 // pred_check_branch
    %11 = sbr.rel (0) target = $region5
  $region4: #{tpu_custom_call.1} parent=0 // pred_region
    _
  $region5: #{tpu_custom_call.1} parent=0 // pred_fallthru
    _
  // Predicated region
  $region6: #{tpu_custom_call.1} parent=0 // pred_check
    _
  $region7: #{tpu_custom_call.1} parent=0 // pred_check_branch
    %13 = sbr.rel (0) target = $region9
  $region8: #{tpu_custom_call.1} parent=0 // pred_region
    _
  $region9: #{tpu_custom_call.1} parent=0 // pred_fallthru
    _
  // Predicated region
  $region10: #{tpu_custom_call.1} parent=0 // pred_check
    _
  $region11: #{tpu_custom_call.1} parent=0 // pred_check_branch
    %15 = sbr.rel (0) target = $region13
  $region12: #{tpu_custom_call.1} parent=0 // pred_region
    _
  $region13: #{tpu_custom_call.1} parent=0 // pred_fallthru
    _
  // Predicated region
  $region14: #{tpu_custom_call.1} parent=0 // pred_check
    _
  $region15: #{tpu_custom_call.1} parent=0 // pred_check_branch
    %17 = sbr.rel (0) target = $region17
  $region16: #{tpu_custom_call.1} parent=0 // pred_region
    _
  $region17: #{tpu_custom_call.1} parent=0 // pred_fallthru
    _
  // Predicated region
  $region18: #{tpu_custom_call.1} parent=0 // pred_check
    _
  $region19: #{tpu_custom_call.1} parent=0 // pred_check_branch
    %19 = sbr.rel (0) target = $region21
  $region20: #{tpu_custom_call.1} parent=0 // pred_region
    _
  $region21: #{tpu_custom_call.1} parent=0 // pred_fallthru
    _
  %v20 = vld [vmem:[%s0] sm:$0xff]
  %v21 = vld [vmem:[%s1] sm:$0x3]
  %v22 = vld [vmem:[%s2] sm:$0x1]
  %v24 = vlaneseq
  %v25 = vshrl.u32 %v24, 7
  %v26 = vsub.s32 0, %v25
  %v27 = vrot.slane %v22, %v26
  %vm29 = vcmask 15360
  %v31 = vsel %vm29, %v20, 0
  %vm33 = vcmask 1041408
  %v35 = vsel %vm33, %v21, 0
  %37 = vmatprep.subr.mxu0 0.0
  %38 = vmatpush1.msra.mxu0 0.0
  %39 = vmatprep.subr.mxu0 0.0
  %40 = vmatpush1.msra.mxu0 0.0
  %41 = vmatprep.subr.mxu0 0.0
  %42 = vmatpush1.msra.mxu0 0.0
  %43 = vmatprep.subr.mxu0 0.0
  %44 = vmatpush1.msra.mxu0 0.0
  %45 = vmatprep.subr.mxu0 0.0
  %46 = vmatpush1.msra.mxu0 0.0
  %47 = vmatprep.subr.mxu0 0.0
  %48 = vmatpush1.msra.mxu0 0.0
  %49 = vmatprep.subr.mxu0 0.0
  %50 = vmatpush1.msra.mxu0 0.0
  %51 = vmatprep.subr.mxu0 0.0
  %52 = vmatpush1.msra.mxu0 0.0
  %53 = vmatprep.subr.mxu0 0.0
  %54 = vmatpush1.msra.mxu0 0.0
  %55 = vmatprep.subr.mxu0 0.0
  %56 = vmatpush1.msra.mxu0 0.0
  %57 = vmatprep.subr.mxu0 0.0
  %58 = vmatpush1.msra.mxu0 0.0
  %59 = vmatprep.subr.mxu0 0.0
  %60 = vmatpush1.msra.mxu0 0.0
  %61 = vmatprep.subr.mxu0 0.0
  %62 = vmatpush1.msra.mxu0 0.0
  %63 = vmatprep.subr.mxu0 0.0
  %64 = vmatpush1.msra.mxu0 0.0
  %65 = vmatprep.subr.mxu0 0.0
  %66 = vmatpush1.msra.mxu0 0.0
  %67 = vmatprep.subr.mxu0 0.0
  %68 = vmatpush1.msra.mxu0 %v35
  %69 = vmatprep.subr.mxu0 0.0
  %70 = vmatpush2.msra.mxu0 0.0
  %71 = vmatprep.subr.mxu0 0.0
  %72 = vmatpush2.msra.mxu0 0.0
  %73 = vmatprep.subr.mxu0 0.0
  %74 = vmatpush2.msra.mxu0 0.0
  %75 = vmatprep.subr.mxu0 0.0
  %76 = vmatpush2.msra.mxu0 0.0
  %77 = vmatprep.subr.mxu0 0.0
  %78 = vmatpush2.msra.mxu0 0.0
  %79 = vmatprep.subr.mxu0 0.0
  %80 = vmatpush2.msra.mxu0 0.0
  %81 = vmatprep.subr.mxu0 0.0
  %82 = vmatpush2.msra.mxu0 0.0
  %83 = vmatprep.subr.mxu0 0.0
  %84 = vmatpush2.msra.mxu0 0.0
  %85 = vmatprep.subr.mxu0 0.0
  %86 = vmatpush2.msra.mxu0 0.0
  %87 = vmatprep.subr.mxu0 0.0
  %88 = vmatpush2.msra.mxu0 0.0
  %89 = vmatprep.subr.mxu0 0.0
  %90 = vmatpush2.msra.mxu0 0.0
  %91 = vmatprep.subr.mxu0 0.0
  %92 = vmatpush2.msra.mxu0 0.0
  %93 = vmatprep.subr.mxu0 0.0
  %94 = vmatpush2.msra.mxu0 0.0
  %95 = vmatprep.subr.mxu0 0.0
  %96 = vmatpush2.msra.mxu0 0.0
  %97 = vmatprep.subr.mxu0 0.0
  %98 = vmatpush2.msra.mxu0 0.0
  %99 = vmatprep.subr.mxu0 0.0
  %100 = vmatpush2.msra.mxu0 0.0
  %101 = vmatprep.mubr.f32.mxu0 0.0
  %102 = vmatmul.mubr.f32.gmra.mxu0 %v31
  %v103 = vpop.f32.mrf.mxu0
  %v104 = vadd.f32 %v27, %v103
  %v105 = vpop.f32.mrf.mxu0
  %106 = vdwg.mxu0
  %v107 = vmax.f32 %v104, 0.0
  %v108 = vld [vmem:[%s3] sm:$0xff]
  %v109 = vld [vmem:[%s3 + $0x8] sm:$0xff]
  %v110 = vld [vmem:[%s3 + $0x10] sm:$0xff]
  %v111 = vld [vmem:[%s3 + $0x18] sm:$0xff]
  %v112 = vld [vmem:[%s3 + $0x20] sm:$0xff]
  %v113 = vld [vmem:[%s3 + $0x28] sm:$0xff]
  %v114 = vld [vmem:[%s3 + $0x30] sm:$0xff]
  %v115 = vld [vmem:[%s3 + $0x38] sm:$0xff]
  %v116 = vld [vmem:[%s3 + $0x40] sm:$0xff]
  %v117 = vld [vmem:[%s3 + $0x48] sm:$0xff]
  %v118 = vld [vmem:[%s3 + $0x50] sm:$0xff]
  %v119 = vld [vmem:[%s3 + $0x58] sm:$0xff]
  %v120 = vld [vmem:[%s3 + $0x60] sm:$0xff]
  %v121 = vld [vmem:[%s3 + $0x68] sm:$0xff]
  %v122 = vld [vmem:[%s3 + $0x70] sm:$0xff]
  %v123 = vld [vmem:[%s3 + $0x78] sm:$0xff]
  %v124 = vld [vmem:[%s4] sm:$0x1]
  %v126 = vlaneseq
  %v127 = vshrl.u32 %v126, 7
  %v128 = vsub.s32 0, %v127
  %v129 = vrot.slane %v124, %v128
  %131 = vmatprep.subr.mxu0 0.0
  %132 = vmatpush1.msra.mxu0 %v123
  %133 = vmatprep.subr.mxu0 0.0
  %134 = vmatpush1.msra.mxu0 %v122
  %135 = vmatprep.subr.mxu0 0.0
  %136 = vmatpush1.msra.mxu0 %v121
  %137 = vmatprep.subr.mxu0 0.0
  %138 = vmatpush1.msra.mxu0 %v120
  %139 = vmatprep.subr.mxu0 0.0
  %140 = vmatpush1.msra.mxu0 %v119
  %141 = vmatprep.subr.mxu0 0.0
  %142 = vmatpush1.msra.mxu0 %v118
  %143 = vmatprep.subr.mxu0 0.0
  %144 = vmatpush1.msra.mxu0 %v117
  %145 = vmatprep.subr.mxu0 0.0
  %146 = vmatpush1.msra.mxu0 %v116
  %147 = vmatprep.subr.mxu0 0.0
  %148 = vmatpush1.msra.mxu0 %v115
  %149 = vmatprep.subr.mxu0 0.0
  %150 = vmatpush1.msra.mxu0 %v114
  %151 = vmatprep.subr.mxu0 0.0
  %152 = vmatpush1.msra.mxu0 %v113
  %153 = vmatprep.subr.mxu0 0.0
  %154 = vmatpush1.msra.mxu0 %v112
  %155 = vmatprep.subr.mxu0 0.0
  %156 = vmatpush1.msra.mxu0 %v111
  %157 = vmatprep.subr.mxu0 0.0
  %158 = vmatpush1.msra.mxu0 %v110
  %159 = vmatprep.subr.mxu0 0.0
  %160 = vmatpush1.msra.mxu0 %v109
  %161 = vmatprep.subr.mxu0 0.0
  %162 = vmatpush1.msra.mxu0 %v108
  %163 = vmatprep.subr.mxu0 0.0
  %164 = vmatpush2.msra.mxu0 0.0
  %165 = vmatprep.subr.mxu0 0.0
  %166 = vmatpush2.msra.mxu0 0.0
  %167 = vmatprep.subr.mxu0 0.0
  %168 = vmatpush2.msra.mxu0 0.0
  %169 = vmatprep.subr.mxu0 0.0
  %170 = vmatpush2.msra.mxu0 0.0
  %171 = vmatprep.subr.mxu0 0.0
  %172 = vmatpush2.msra.mxu0 0.0
  %173 = vmatprep.subr.mxu0 0.0
  %174 = vmatpush2.msra.mxu0 0.0
  %175 = vmatprep.subr.mxu0 0.0
  %176 = vmatpush2.msra.mxu0 0.0
  %177 = vmatprep.subr.mxu0 0.0
  %178 = vmatpush2.msra.mxu0 0.0
  %179 = vmatprep.subr.mxu0 0.0
  %180 = vmatpush2.msra.mxu0 0.0
  %181 = vmatprep.subr.mxu0 0.0
  %182 = vmatpush2.msra.mxu0 0.0
  %183 = vmatprep.subr.mxu0 0.0
  %184 = vmatpush2.msra.mxu0 0.0
  %185 = vmatprep.subr.mxu0 0.0
  %186 = vmatpush2.msra.mxu0 0.0
  %187 = vmatprep.subr.mxu0 0.0
  %188 = vmatpush2.msra.mxu0 0.0
  %189 = vmatprep.subr.mxu0 0.0
  %190 = vmatpush2.msra.mxu0 0.0
  %191 = vmatprep.subr.mxu0 0.0
  %192 = vmatpush2.msra.mxu0 0.0
  %193 = vmatprep.subr.mxu0 0.0
  %194 = vmatpush2.msra.mxu0 0.0
  %195 = vmatprep.mubr.f32.mxu0 0.0
  %196 = vmatmul.mubr.f32.gmra.mxu0 %v107
  %v197 = vpop.f32.mrf.mxu0
  %v198 = vadd.f32 %v129, %v197
  %v199 = vpop.f32.mrf.mxu0
  %200 = vdwg.mxu0
  %201 = vst.msk [vmem:[%s5] sm:$0xff] %vm29, %v198
  // Predicated region
  $region22: #{tpu_custom_call.1} parent=0 // pred_check
    _
  $region23: #{tpu_custom_call.1} parent=0 // pred_check_branch
    %203 = sbr.rel (0) target = $region25
  $region24: #{tpu_custom_call.1} parent=0 // pred_region
    _
  $region25: #{tpu_custom_call.1} parent=0 // pred_fallthru
    _
  // Predicated region
  $region26: #{tpu_custom_call.1} parent=0 // pred_check
    _
  $region27: #{tpu_custom_call.1} parent=0 // pred_check_branch
    %205 = sbr.rel (0) target = $region29
  $region28: #{tpu_custom_call.1} parent=0 // pred_region
    _
  $region29: #{tpu_custom_call.1} parent=0 // pred_fallthru
    _

</llo_original>
